<compile_context>
chip_gen: v7x
topology: tpu7x:2x2x1
jax: 0.10.0
libtpu: 0.0.40
codegen_flags: <defaults>
</compile_context>

<pallas_src>
import functools
import math

import jax
import jax.numpy as jnp
from jax import lax
from jax.experimental import pallas as pl
from jax.experimental.pallas import tpu as pltpu

BBOX_XFORM_CLIP = math.log(1000.0 / 16.0)  # BoxCoder default clamp on dw/dh


# ---------------------------------------------------------------------------
# Pallas kernel: fused sigmoid + box decode + clip + min-size mask + class argmax
# ---------------------------------------------------------------------------
def _decode_kernel(imsz_ref,                 # scalar-prefetch SMEM (N, 2) int32: (img_w, img_h)
                   obj_reg_ref,              # (1, 5, K) f32: rows 0..3 = dx,dy,dw,dh ; row 4 = obj logits
                   cls_ref,                  # (1, C, K) bf16
                   anc_ref,                  # (1, 5, K) f32: rows 0..3 = anchors x1,y1,x2,y2 ; row 4 = valid
                   out_ref,                  # (1, 8, K) f32: x1,y1,x2,y2, raw, masked, label, 0
                   *, min_size, num_classes):
    n = pl.program_id(0)
    img_w = imsz_ref[n, 0].astype(jnp.float32)
    img_h = imsz_ref[n, 1].astype(jnp.float32)

    anc = anc_ref[0]                         # (5, K)
    a_lo = anc[0:2]                          # (2, K): x1, y1
    a_hi = anc[2:4]                          # (2, K): x2, y2
    valid = anc[4:5] > 0.5                   # (1, K): lane-padding mask

    rv = obj_reg_ref[0]                      # (5, K)
    dxy = rv[0:2]                            # dx, dy
    dwh = jnp.minimum(rv[2:4], BBOX_XFORM_CLIP)
    obj = rv[4:5]                            # objectness logits

    # BoxCoder.decode, weights = (1, 1, 1, 1), TO_REMOVE = 1, vectorized over coord pairs
    wh = a_hi - a_lo + 1.0                   # widths, heights
    ctr = a_lo + 0.5 * wh                    # ctr_x, ctr_y
    pred_ctr = dxy * wh + ctr
    pred_wh = jnp.exp(dwh) * wh

    lo = pred_ctr - 0.5 * pred_wh            # x1, y1
    hi = pred_ctr + 0.5 * pred_wh - 1.0      # x2, y2

    # BoxList.clip_to_image(remove_empty=False), TO_REMOVE = 1
    row = lax.broadcasted_iota(jnp.int32, lo.shape, 0)
    lim = jnp.where(row == 0, img_w - 1.0, img_h - 1.0)
    lo = jnp.clip(lo, 0.0, lim)
    hi = jnp.clip(hi, 0.0, lim)

    # remove_small_boxes folded into the masked score row
    sz = hi - lo + 1.0                       # widths, heights of decoded boxes
    keep = (sz[0:1] >= min_size) & (sz[1:2] >= min_size)

    scores = jax.nn.sigmoid(obj)
    neg_inf = jnp.float32(-jnp.inf)
    raw = jnp.where(valid, scores, neg_inf)           # used for pre-NMS top-k (matches torch)
    masked = jnp.where(valid & keep, scores, neg_inf)  # used for NMS (small boxes removed)

    # labels = argmax(cls, -1) + 1  (reduction over the class sublane axis)
    cls = cls_ref[0].astype(jnp.float32)     # (C, K); bf16 in HBM, widened here
    cmax = jnp.max(cls, axis=0, keepdims=True)
    cidx = lax.broadcasted_iota(jnp.int32, cls.shape, 0)
    cand = jnp.where(cls >= cmax, cidx, num_classes)
    labels = (jnp.min(cand, axis=0, keepdims=True) + 1).astype(jnp.float32)

    out = jnp.concatenate([lo, hi, raw, masked, labels, jnp.zeros_like(raw)], axis=0)  # (8, K)
    out_ref[...] = out[None]


def decode_all(obj_reg, cls, anc_valid, im_sizes, min_size):
    """obj_reg (N,5,Ktot) f32, cls (N,C,Ktot) bf16, anc_valid (1,5,Ktot) f32,
    im_sizes (N,2) int32.  Returns (N,8,Ktot) f32 packed decode slab."""
    N, _, K = obj_reg.shape
    C = cls.shape[1]
    kernel = functools.partial(_decode_kernel, min_size=float(min_size), num_classes=C)

    grid_spec = pltpu.PrefetchScalarGridSpec(
        num_scalar_prefetch=1,
        grid=(N,),
        in_specs=[
            pl.BlockSpec((1, 5, K), lambda n, sz: (n, 0, 0)),   # packed reg + obj
            pl.BlockSpec((1, C, K), lambda n, sz: (n, 0, 0)),   # bf16 class logits
            pl.BlockSpec((1, 5, K), lambda n, sz: (0, 0, 0)),   # anchors + valid (shared, no n)
        ],
        out_specs=pl.BlockSpec((1, 8, K), lambda n, sz: (n, 0, 0)),
    )
    return pl.pallas_call(
        kernel,
        out_shape=jax.ShapeDtypeStruct((N, 8, K), jnp.float32),
        grid_spec=grid_spec,
        compiler_params=pltpu.CompilerParams(dimension_semantics=("parallel",)),
    )(im_sizes, obj_reg, cls, anc_valid)


# ---------------------------------------------------------------------------
# Plain-JAX glue (layout fusion, top-k, greedy NMS, level concat)
# ---------------------------------------------------------------------------
def make_anchors(H, W, A, stride):
    # TODO(synk): synthetic anchor generator for the demo; real YOLOv3 priors would
    # come from the AnchorGenerator and be passed in the same (K, 4) (h, w, a) order.
    ys, xs = jnp.meshgrid(jnp.arange(H, dtype=jnp.float32),
                          jnp.arange(W, dtype=jnp.float32), indexing="ij")
    cx = (xs + 0.5) * stride
    cy = (ys + 0.5) * stride
    sizes = stride * (1.0 + jnp.arange(A, dtype=jnp.float32))
    half = 0.5 * sizes
    x1 = cx[..., None] - half
    y1 = cy[..., None] - half
    x2 = cx[..., None] + half - 1.0
    y2 = cy[..., None] + half - 1.0
    boxes = jnp.stack([x1, y1, x2, y2], axis=-1)  # (H, W, A, 4) -> (h, w, a) flat order
    return boxes.reshape(H * W * A, 4)


def greedy_nms(boxes, scores, iou_thresh, max_out):
    """Fixed-size greedy NMS. Returns (max_out,) indices, -1 for empty slots."""
    # TODO(synk): could be a dedicated Pallas kernel (scores in VMEM, IoU rows on the
    # fly) for realistic pre_nms_top_n; for small M the vmapped XLA version is fine.
    M = boxes.shape[0]
    x1, y1, x2, y2 = boxes[:, 0], boxes[:, 1], boxes[:, 2], boxes[:, 3]
    areas = (x2 - x1 + 1.0) * (y2 - y1 + 1.0)
    xx1 = jnp.maximum(x1[:, None], x1[None, :])
    yy1 = jnp.maximum(y1[:, None], y1[None, :])
    xx2 = jnp.minimum(x2[:, None], x2[None, :])
    yy2 = jnp.minimum(y2[:, None], y2[None, :])
    w = jnp.maximum(xx2 - xx1 + 1.0, 0.0)
    h = jnp.maximum(yy2 - yy1 + 1.0, 0.0)
    inter = w * h
    iou = inter / (areas[:, None] + areas[None, :] - inter)

    neg_inf = jnp.float32(-jnp.inf)

    def body(i, state):
        sc, keep = state
        j = jnp.argmax(sc)
        ok = sc[j] > neg_inf
        keep = keep.at[i].set(jnp.where(ok, j.astype(jnp.int32), jnp.int32(-1)))
        suppress = (iou[j] > iou_thresh) | (jnp.arange(M) == j)
        sc = jnp.where(ok & suppress, neg_inf, sc)
        return sc, keep

    keep0 = jnp.full((max_out,), -1, dtype=jnp.int32)
    _, keep = lax.fori_loop(0, max_out, body, (scores, keep0))
    return keep


def _topk_nms_single(boxes, raw, masked, labels, *, pre_n, post_n, nms_thresh):
    """Single image, single level: pre-NMS top-k on RAW scores, then greedy NMS."""
    _, top_idx = lax.top_k(raw, pre_n)
    b = boxes[top_idx]                       # (pre_n, 4)
    s = masked[top_idx]                      # raw score, -inf where small box / lane padding
    l = labels[top_idx]
    sel = greedy_nms(b, s, nms_thresh, post_n)
    valid = sel >= 0
    sel_safe = jnp.maximum(sel, 0)
    return (b[sel_safe],
            jnp.where(valid, s[sel_safe], -jnp.inf),
            jnp.where(valid, l[sel_safe], 0),
            valid)


def yolov3_postprocess(anchors_per_level, im_sizes, objectness, box_regression, cls_logits,
                       pre_nms_top_n, post_nms_top_n, nms_thresh, min_size,
                       fpn_post_nms_top_n):
    N = objectness[0].shape[0]
    C = cls_logits[0].shape[1] // objectness[0].shape[1]

    packed_or, packed_cls, packed_anc, packed_valid = [], [], [], []
    level_meta = []                       # (lane offset, padded K, real K)
    off = 0
    for anc_lvl, obj, reg, cls in zip(anchors_per_level, objectness, box_regression, cls_logits):
        _, A, H, W = obj.shape
        K = A * H * W
        Kp = ((K + 127) // 128) * 128     # lane-align per level
        pad = Kp - K

        # Fused permute_and_flatten + transpose: (N, A*Cx, H, W) -> (N, Cx, K), K = (h, w, a)
        def to_cK(x, Cx):
            x = x.reshape(N, A, Cx, H, W)
            x = jnp.transpose(x, (0, 2, 3, 4, 1))      # (N, Cx, H, W, A)
            return x.reshape(N, Cx, K)

        reg_ck = to_cK(reg, 4)                         # (N, 4, K)
        obj_ck = to_cK(obj, 1)                         # (N, 1, K)
        cls_ck = to_cK(cls, C)                         # (N, C, K)
        anc_ck = anc_lvl.T                             # (4, K)

        or_ck = jnp.concatenate([reg_ck, obj_ck], axis=1)   # (N, 5, K): dx,dy,dw,dh,obj
        if pad:
            or_ck = jnp.pad(or_ck, ((0, 0), (0, 0), (0, pad)))
            cls_ck = jnp.pad(cls_ck, ((0, 0), (0, 0), (0, pad)))
            anc_ck = jnp.pad(anc_ck, ((0, 0), (0, pad)))
        valid_ck = jnp.pad(jnp.ones((1, K), jnp.float32), ((0, 0), (0, pad)))

        packed_or.append(or_ck)
        packed_cls.append(cls_ck)
        packed_anc.append(anc_ck)
        packed_valid.append(valid_ck)
        level_meta.append((off, Kp, K))
        off += Kp

    obj_reg = jnp.concatenate(packed_or, axis=2)                         # (N, 5, Ktot)
    cls_all = jnp.concatenate(packed_cls, axis=2).astype(jnp.bfloat16)   # (N, C, Ktot) bf16
    anc_valid = jnp.concatenate(
        [jnp.concatenate(packed_anc, axis=1),
         jnp.concatenate(packed_valid, axis=1)], axis=0)[None]           # (1, 5, Ktot)

    # One fused Pallas call over all FPN levels.
    dec = decode_all(obj_reg, cls_all, anc_valid, im_sizes, min_size)    # (N, 8, Ktot)

    boxes_all = jnp.transpose(dec[:, 0:4, :], (0, 2, 1))                 # (N, Ktot, 4)
    raw_all = dec[:, 4, :]                                               # (N, Ktot)
    masked_all = dec[:, 5, :]
    labels_all = dec[:, 6, :].astype(jnp.int32)

    # Per-level top-k + NMS (vmapped over the batch).
    per_level = []
    for (o, Kp, K) in level_meta:
        pre_n = min(pre_nms_top_n, K)
        fn = functools.partial(_topk_nms_single, pre_n=pre_n,
                               post_n=post_nms_top_n, nms_thresh=nms_thresh)
        per_level.append(jax.vmap(fn)(boxes_all[:, o:o + Kp],
                                      raw_all[:, o:o + Kp],
                                      masked_all[:, o:o + Kp],
                                      labels_all[:, o:o + Kp]))

    # cat_boxlist across levels + select_over_all_levels (inference path).
    all_b = jnp.concatenate([r[0] for r in per_level], axis=1)           # (N, L*post_n, 4)
    all_s = jnp.concatenate([r[1] for r in per_level], axis=1)
    all_l = jnp.concatenate([r[2] for r in per_level], axis=1)

    k = min(fpn_post_nms_top_n, all_s.shape[1])
    fin_s, sel = lax.top_k(all_s, k)                                     # (N, k)
    fin_b = jnp.take_along_axis(all_b, sel[..., None], axis=1)
    fin_l = jnp.take_along_axis(all_l, sel, axis=1)
    # TODO(synk): variable-length BoxList outputs are represented with fixed-size
    # padding + a validity mask instead of per-image ragged tensors.
    return {"boxes": fin_b, "scores": fin_s, "labels": fin_l,
            "valid": fin_s > -jnp.inf}


# ---------------------------------------------------------------------------
if __name__ == "__main__":
    key = jax.random.PRNGKey(0)
    N, A, C = 2, 3, 4
    level_hw = [(8, 8), (4, 4)]
    strides = [8, 16]

    pre_nms_top_n = 64
    post_nms_top_n = 16
    fpn_post_nms_top_n = 24
    nms_thresh = 0.7
    min_size = 2

    # BoxList.size per image: (image_width, image_height)
    im_sizes = jnp.array([[64, 64], [60, 56]], dtype=jnp.int32)

    objectness, box_regression, cls_logits, anchors = [], [], [], []
    for (H, W), stride in zip(level_hw, strides):
        key, k1, k2, k3 = jax.random.split(key, 4)
        objectness.append(jax.random.normal(k1, (N, A, H, W), jnp.float32))
        box_regression.append(0.1 * jax.random.normal(k2, (N, A * 4, H, W), jnp.float32))
        cls_logits.append(jax.random.normal(k3, (N, A * C, H, W), jnp.float32))
        anchors.append(make_anchors(H, W, A, stride))

    postprocess = jax.jit(functools.partial(
        yolov3_postprocess,
        pre_nms_top_n=pre_nms_top_n, post_nms_top_n=post_nms_top_n,
        nms_thresh=nms_thresh, min_size=min_size,
        fpn_post_nms_top_n=fpn_post_nms_top_n))

    results = postprocess(anchors, im_sizes, objectness, box_regression, cls_logits)
    jax.block_until_ready(results)
    print("KERNEL_OK")
</pallas_src>

<mosaic_0001>
module attributes {stable_mosaic.version = 11 : i64} {
  func.func @_decode_kernel(%arg0: i32, %arg1: memref<2x2xi32, #tpu.memory_space<smem>>, %arg2: memref<1x5x384xf32, #tpu.memory_space<vmem>>, %arg3: memref<1x4x384xbf16, #tpu.memory_space<vmem>>, %arg4: memref<1x5x384xf32, #tpu.memory_space<vmem>>, %arg5: memref<1x8x384xf32, #tpu.memory_space<vmem>>) attributes {dimension_semantics = [#tpu.dimension_semantics<parallel>], iteration_bounds = array<i64: 2>, scalar_prefetch = 1 : i64, scratch_operands = 0 : i64, tpu.core_type = #tpu.core_type<tc>, window_params = [{transform_indices = @transform_0, window_bounds = array<i64: 1, 5, 384>}, {transform_indices = @transform_1, window_bounds = array<i64: 1, 4, 384>}, {pipeline_mode = #tpu.pipeline_mode<synchronous>, transform_indices = @transform_2, window_bounds = array<i64: 1, 5, 384>}, {transform_indices = @transform_3, window_bounds = array<i64: 1, 8, 384>}]} {
    %0 = arith.index_cast %arg0 : i32 to index
    %c0 = arith.constant 0 : index
    %1 = memref.load %arg1[%0, %c0] : memref<2x2xi32, #tpu.memory_space<smem>>
    %2 = arith.sitofp %1 : i32 to f32
    %3 = arith.index_cast %arg0 : i32 to index
    %c1 = arith.constant 1 : index
    %4 = memref.load %arg1[%3, %c1] : memref<2x2xi32, #tpu.memory_space<smem>>
    %5 = arith.sitofp %4 : i32 to f32
    %c0_0 = arith.constant 0 : index
    %c0_1 = arith.constant 0 : index
    %c0_2 = arith.constant 0 : index
    %6 = vector.load %arg4[%c0_0, %c0_1, %c0_2] : memref<1x5x384xf32, #tpu.memory_space<vmem>>, vector<1x5x384xf32>
    %7 = vector.shape_cast %6 : vector<1x5x384xf32> to vector<5x384xf32>
    %8 = vector.extract_strided_slice %7 {offsets = [0, 0], sizes = [2, 384], strides = [1, 1]} : vector<5x384xf32> to vector<2x384xf32>
    %9 = vector.extract_strided_slice %7 {offsets = [2, 0], sizes = [2, 384], strides = [1, 1]} : vector<5x384xf32> to vector<2x384xf32>
    %10 = vector.extract_strided_slice %7 {offsets = [4, 0], sizes = [1, 384], strides = [1, 1]} : vector<5x384xf32> to vector<1x384xf32>
    %cst = arith.constant 5.000000e-01 : f32
    %11 = vector.broadcast %cst : f32 to vector<1x384xf32>
    %12 = arith.cmpf ogt, %10, %11 : vector<1x384xf32>
    %c0_3 = arith.constant 0 : index
    %c0_4 = arith.constant 0 : index
    %c0_5 = arith.constant 0 : index
    %13 = vector.load %arg2[%c0_3, %c0_4, %c0_5] : memref<1x5x384xf32, #tpu.memory_space<vmem>>, vector<1x5x384xf32>
    %14 = vector.shape_cast %13 : vector<1x5x384xf32> to vector<5x384xf32>
    %15 = vector.extract_strided_slice %14 {offsets = [0, 0], sizes = [2, 384], strides = [1, 1]} : vector<5x384xf32> to vector<2x384xf32>
    %16 = vector.extract_strided_slice %14 {offsets = [2, 0], sizes = [2, 384], strides = [1, 1]} : vector<5x384xf32> to vector<2x384xf32>
    %cst_6 = arith.constant 4.13516665 : f32
    %17 = vector.broadcast %cst_6 : f32 to vector<2x384xf32>
    %18 = arith.minimumf %16, %17 : vector<2x384xf32>
    %19 = vector.extract_strided_slice %14 {offsets = [4, 0], sizes = [1, 384], strides = [1, 1]} : vector<5x384xf32> to vector<1x384xf32>
    %20 = arith.subf %9, %8 : vector<2x384xf32>
    %cst_7 = arith.constant 1.000000e+00 : f32
    %21 = vector.broadcast %cst_7 : f32 to vector<2x384xf32>
    %22 = arith.addf %20, %21 : vector<2x384xf32>
    %cst_8 = arith.constant 5.000000e-01 : f32
    %23 = vector.broadcast %cst_8 : f32 to vector<2x384xf32>
    %24 = arith.mulf %23, %22 : vector<2x384xf32>
    %25 = arith.addf %8, %24 : vector<2x384xf32>
    %26 = arith.mulf %15, %22 : vector<2x384xf32>
    %27 = arith.addf %26, %25 : vector<2x384xf32>
    %28 = math.exp %18 : vector<2x384xf32>
    %29 = arith.mulf %28, %22 : vector<2x384xf32>
    %cst_9 = arith.constant 5.000000e-01 : f32
    %30 = vector.broadcast %cst_9 : f32 to vector<2x384xf32>
    %31 = arith.mulf %30, %29 : vector<2x384xf32>
    %32 = arith.subf %27, %31 : vector<2x384xf32>
    %cst_10 = arith.constant 5.000000e-01 : f32
    %33 = vector.broadcast %cst_10 : f32 to vector<2x384xf32>
    %34 = arith.mulf %33, %29 : vector<2x384xf32>
    %35 = arith.addf %27, %34 : vector<2x384xf32>
    %cst_11 = arith.constant 1.000000e+00 : f32
    %36 = vector.broadcast %cst_11 : f32 to vector<2x384xf32>
    %37 = arith.subf %35, %36 : vector<2x384xf32>
    %38 = tpu.iota {dimensions = array<i32: 0>} : vector<2x384xi32>
    %c0_i32 = arith.constant 0 : i32
    %39 = vector.broadcast %c0_i32 : i32 to vector<2x384xi32>
    %40 = arith.cmpi eq, %38, %39 : vector<2x384xi32>
    %cst_12 = arith.constant 1.000000e+00 : f32
    %41 = arith.subf %2, %cst_12 : f32
    %cst_13 = arith.constant 1.000000e+00 : f32
    %42 = arith.subf %5, %cst_13 : f32
    %43 = vector.broadcast %41 : f32 to vector<2x384xf32>
    %44 = vector.broadcast %42 : f32 to vector<2x384xf32>
    %45 = arith.select %40, %43, %44 : vector<2x384xi1>, vector<2x384xf32>
    %cst_14 = arith.constant 0.000000e+00 : f32
    %46 = vector.broadcast %cst_14 : f32 to vector<2x384xf32>
    %47 = arith.maximumf %46, %32 : vector<2x384xf32>
    %48 = arith.minimumf %45, %47 : vector<2x384xf32>
    %cst_15 = arith.constant 0.000000e+00 : f32
    %49 = vector.broadcast %cst_15 : f32 to vector<2x384xf32>
    %50 = arith.maximumf %49, %37 : vector<2x384xf32>
    %51 = arith.minimumf %45, %50 : vector<2x384xf32>
    %52 = arith.subf %51, %48 : vector<2x384xf32>
    %cst_16 = arith.constant 1.000000e+00 : f32
    %53 = vector.broadcast %cst_16 : f32 to vector<2x384xf32>
    %54 = arith.addf %52, %53 : vector<2x384xf32>
    %55 = vector.extract_strided_slice %54 {offsets = [0, 0], sizes = [1, 384], strides = [1, 1]} : vector<2x384xf32> to vector<1x384xf32>
    %cst_17 = arith.constant 2.000000e+00 : f32
    %56 = vector.broadcast %cst_17 : f32 to vector<1x384xf32>
    %57 = arith.cmpf oge, %55, %56 : vector<1x384xf32>
    %58 = vector.extract_strided_slice %54 {offsets = [1, 0], sizes = [1, 384], strides = [1, 1]} : vector<2x384xf32> to vector<1x384xf32>
    %cst_18 = arith.constant 2.000000e+00 : f32
    %59 = vector.broadcast %cst_18 : f32 to vector<1x384xf32>
    %60 = arith.cmpf oge, %58, %59 : vector<1x384xf32>
    %61 = arith.andi %57, %60 : vector<1x384xi1>
    %62 = arith.negf %19 : vector<1x384xf32>
    %63 = math.exp %62 : vector<1x384xf32>
    %cst_19 = arith.constant 1.000000e+00 : f32
    %64 = vector.broadcast %cst_19 : f32 to vector<1x384xf32>
    %65 = arith.addf %64, %63 : vector<1x384xf32>
    %66 = arith.divf %64, %65 : vector<1x384xf32>
    %cst_20 = arith.constant 0xFF800000 : f32
    %67 = vector.broadcast %cst_20 : f32 to vector<1x384xf32>
    %68 = arith.select %12, %66, %67 : vector<1x384xi1>, vector<1x384xf32>
    %69 = arith.andi %12, %61 : vector<1x384xi1>
    %cst_21 = arith.constant 0xFF800000 : f32
    %70 = vector.broadcast %cst_21 : f32 to vector<1x384xf32>
    %71 = arith.select %69, %66, %70 : vector<1x384xi1>, vector<1x384xf32>
    %c0_22 = arith.constant 0 : index
    %c0_23 = arith.constant 0 : index
    %c0_24 = arith.constant 0 : index
    %72 = vector.load %arg3[%c0_22, %c0_23, %c0_24] : memref<1x4x384xbf16, #tpu.memory_space<vmem>>, vector<1x4x384xbf16>
    %73 = vector.shape_cast %72 : vector<1x4x384xbf16> to vector<4x384xbf16>
    %74 = arith.extf %73 : vector<4x384xbf16> to vector<4x384xf32>
    %cst_25 = arith.constant dense<0xFF800000> : vector<384xf32>
    %75 = vector.multi_reduction <maximumf>, %74, %cst_25 [0] : vector<4x384xf32> to vector<384xf32>
    %76 = vector.shape_cast %75 : vector<384xf32> to vector<1x384xf32>
    %77 = tpu.iota {dimensions = array<i32: 0>} : vector<4x384xi32>
    %78 = vector.broadcast %76 : vector<1x384xf32> to vector<4x384xf32>
    %79 = arith.cmpf oge, %74, %78 : vector<4x384xf32>
    %c4_i32 = arith.constant 4 : i32
    %80 = vector.broadcast %c4_i32 : i32 to vector<4x384xi32>
    %81 = arith.select %79, %77, %80 : vector<4x384xi1>, vector<4x384xi32>
    %cst_26 = arith.constant dense<2147483647> : vector<384xi32>
    %82 = vector.multi_reduction <minsi>, %81, %cst_26 [0] : vector<4x384xi32> to vector<384xi32>
    %83 = vector.shape_cast %82 : vector<384xi32> to vector<1x384xi32>
    %c1_i32 = arith.constant 1 : i32
    %84 = vector.broadcast %c1_i32 : i32 to vector<1x384xi32>
    %85 = arith.addi %83, %84 : vector<1x384xi32>
    %86 = arith.sitofp %85 : vector<1x384xi32> to vector<1x384xf32>
    %cst_27 = arith.constant 0.000000e+00 : f32
    %87 = vector.broadcast %cst_27 : f32 to vector<1x384xf32>
    %88 = tpu.concatenate %48, %51, %68, %71, %86, %87 in 0 : vector<2x384xf32>, vector<2x384xf32>, vector<1x384xf32>, vector<1x384xf32>, vector<1x384xf32>, vector<1x384xf32> -> vector<8x384xf32>
    %89 = vector.shape_cast %88 : vector<8x384xf32> to vector<1x8x384xf32>
    %c0_28 = arith.constant 0 : index
    %c0_29 = arith.constant 0 : index
    %c0_30 = arith.constant 0 : index
    %90 = vector.load %arg5[%c0_28, %c0_29, %c0_30] : memref<1x8x384xf32, #tpu.memory_space<vmem>>, vector<1x8x384xf32>
    tpu.vector_store %arg5[%c0_28, %c0_29, %c0_30], %89 {strides = array<i32>} : memref<1x8x384xf32, #tpu.memory_space<vmem>>, vector<1x8x384xf32>,
    return
  }
  func.func @transform_0(%arg0: i32, %arg1: memref<2x2xi32, #tpu.memory_space<smem>>) -> (i32, i32, i32) {
    %c0_i32 = arith.constant 0 : i32
    %c0_i32_0 = arith.constant 0 : i32
    %c0_i32_1 = arith.constant 0 : i32
    return %arg0, %c0_i32, %c0_i32_0 : i32, i32, i32
  }
  func.func @transform_1(%arg0: i32, %arg1: memref<2x2xi32, #tpu.memory_space<smem>>) -> (i32, i32, i32) {
    %c0_i32 = arith.constant 0 : i32
    %c0_i32_0 = arith.constant 0 : i32
    %c0_i32_1 = arith.constant 0 : i32
    return %arg0, %c0_i32, %c0_i32_0 : i32, i32, i32
  }
  func.func @transform_2(%arg0: i32, %arg1: memref<2x2xi32, #tpu.memory_space<smem>>) -> (i32, i32, i32) {
    %c0_i32 = arith.constant 0 : i32
    %c0_i32_0 = arith.constant 0 : i32
    %c0_i32_1 = arith.constant 0 : i32
    %c0_i32_2 = arith.constant 0 : i32
    return %c0_i32, %c0_i32_0, %c0_i32_1 : i32, i32, i32
  }
  func.func @transform_3(%arg0: i32, %arg1: memref<2x2xi32, #tpu.memory_space<smem>>) -> (i32, i32, i32) {
    %c0_i32 = arith.constant 0 : i32
    %c0_i32_0 = arith.constant 0 : i32
    %c0_i32_1 = arith.constant 0 : i32
    return %arg0, %c0_i32, %c0_i32_0 : i32, i32, i32
  }
}

</mosaic_0001>

<llo_original>
// kernel: yolov3_postprocess.1
$region0: #{yolov3_postprocess.1}
  #allocation0 [shape = 'u32[]', space=smem, size = 0x4, offset = 0x4, fixed_abs, tag = 'smem constant byte address 0x4 - core index']
  #allocation1 [shape = 'u32[144,128]{1,0:T(1,128)}', space=vmem, size = 0x12000, scoped, tag = 'internal scratch']
  #allocation2 [shape = 's32[1]{0}', space=sflag, size = 0x4, scoped, tag = 'scoped memory for yolov3_postprocess.1']
  #allocation3 [shape = 'u8[1024]{0}', space=smem, size = 0x400, scoped, tag = 'prefetched SMEM operand 0']
  %s0 = inlined_call_operand.vmem [shape: s32[2,2], index: 0, kind: input, shape index: {}]
  %s1 = inlined_call_operand.vmem [shape: f32[2,5,384], index: 1, kind: input, shape index: {}]
  %s2 = inlined_call_operand.vmem [shape: bf16[2,4,384], index: 2, kind: input, shape index: {}]
  %s3 = inlined_call_operand.vmem [shape: f32[1,5,384], index: 3, kind: input, shape index: {}]
  %s4 = inlined_call_operand.vmem [shape: f32[2,8,384], index: 4, kind: output, shape index: {}]
  %s5 = sld [smem:[#allocation0]]
  $region45: #{yolov3_postprocess.1} parent=0
    _
  %s7 = ssub.s32 1, %s5
  %s8 = scalar_select 0, %s7, %s5
  %s9 = sshll.u32 %s0, 4
  %s10 = int_to_ptr.vmem [resolvable:$true] %s9
  %12 = dma.vmem_to_smem %s10, 32, [#allocation3], [#allocation2]
  %13 = dma.done [#allocation2], 32
  %14 = sfence
  loop: start=0, step=1, limit=4
  $region2: #{yolov3_postprocess.1} parent=0 // loop_pre_header
    _
  $region3: #{yolov3_postprocess.1} parent=0 // loop_header
    %s16 = sphi 0, %s20
    %p17 = scmp.ge.s32.totalorder %s16, 4
    %s26 = sphi 0, %s28
    %s29 = sphi 0, %s26
    %s30 = sphi 0, %s29
    %s46 = sphi 0, %s30
    %s52 = sphi 0, %s54
    %s55 = sphi 0, %s52
    %s56 = sphi 0, %s55
    %s72 = sphi 0, %s56
    %s76 = sphi 0, %s76
    %s78 = sphi 0, %s76
    %s79 = sphi 0, %s78
    %s93 = sphi 0, %s79
    %s99 = sphi 0, %s101
    %s102 = sphi 0, %s99
    %s103 = sphi 0, %s102
    %s119 = sphi 0, %s103
  $region4: #{yolov3_postprocess.1} parent=0 // loop_header_branch
    %19 = sbr.rel (%p17) target = $region8
  $region5: #{yolov3_postprocess.1} parent=0 // loop_body
    %s21 = ssub.s32 %s16, 1
    %s22 = ssub.s32 %s16, 2
    %s23 = sadd.s32 %s16, 1
    %s24 = ssub.s32 %s16, %s23
    %p25 = scmp.eq.s32.totalorder %s24, 0
    %s27 = sadd.s32 %s26, 1
    %s28 = scalar_select %p25, %s26, %s27
    %p31 = pneg %p25
    %p32 = scmp.eq.s32.totalorder %s16, 1
    %p33 = por %p31, %p32
    %p34 = scmp.ne.s32.totalorder %s26, %s29
    %p35 = scmp.eq.s32.totalorder %s16, 0
    %p36 = por %p34, %p35
    %p37 = scmp.ne.s32.totalorder %s26, %s29
    %p38 = scmp.eq.s32.totalorder %s21, 1
    %p39 = por %p37, %p38
    %p40 = scmp.ne.s32.totalorder %s29, %s30
    %p41 = scmp.eq.s32.totalorder %s21, 0
    %p42 = por %p40, %p41
    %p43 = scmp.ne.s32.totalorder %s29, %s30
    %p44 = scmp.eq.s32.totalorder %s22, 1
    %p45 = por %p43, %p44
    %p47 = scmp.ne.s32.totalorder %s30, %s46
    %p48 = scmp.eq.s32.totalorder %s22, 0
    %p49 = por %p47, %p48
    %s50 = ssub.s32 %s16, %s23
    %p51 = scmp.eq.s32.totalorder %s50, 0
    %s53 = sadd.s32 %s52, 1
    %s54 = scalar_select %p51, %s52, %s53
    %p57 = pneg %p51
    %p58 = scmp.eq.s32.totalorder %s16, 1
    %p59 = por %p57, %p58
    %p60 = scmp.ne.s32.totalorder %s52, %s55
    %p61 = scmp.eq.s32.totalorder %s16, 0
    %p62 = por %p60, %p61
    %p63 = scmp.ne.s32.totalorder %s52, %s55
    %p64 = scmp.eq.s32.totalorder %s21, 1
    %p65 = por %p63, %p64
    %p66 = scmp.ne.s32.totalorder %s55, %s56
    %p67 = scmp.eq.s32.totalorder %s21, 0
    %p68 = por %p66, %p67
    %p69 = scmp.ne.s32.totalorder %s55, %s56
    %p70 = scmp.eq.s32.totalorder %s22, 1
    %p71 = por %p69, %p70
    %p73 = scmp.ne.s32.totalorder %s56, %s72
    %p74 = scmp.eq.s32.totalorder %s22, 0
    %p75 = por %p73, %p74
    %s77 = sadd.s32 %s76, 1
    %p80 = scmp.eq.s32.totalorder %s16, 1
    %p81 = scmp.ne.s32.totalorder %s76, %s78
    %p82 = scmp.eq.s32.totalorder %s16, 0
    %p83 = por %p81, %p82
    %p84 = scmp.ne.s32.totalorder %s76, %s78
    %p85 = scmp.eq.s32.totalorder %s21, 1
    %p86 = por %p84, %p85
    %p87 = scmp.ne.s32.totalorder %s78, %s79
    %p88 = scmp.eq.s32.totalorder %s21, 0
    %p89 = por %p87, %p88
    %p90 = scmp.ne.s32.totalorder %s78, %s79
    %p91 = scmp.eq.s32.totalorder %s22, 1
    %p92 = por %p90, %p91
    %p94 = scmp.ne.s32.totalorder %s79, %s93
    %p95 = scmp.eq.s32.totalorder %s22, 0
    %p96 = por %p94, %p95
    %s97 = ssub.s32 %s16, %s23
    %p98 = scmp.eq.s32.totalorder %s97, 0
    %s100 = sadd.s32 %s99, 1
    %s101 = scalar_select %p98, %s99, %s100
    %p104 = pneg %p98
    %p105 = scmp.eq.s32.totalorder %s16, 1
    %p106 = por %p104, %p105
    %p107 = scmp.ne.s32.totalorder %s99, %s102
    %p108 = scmp.eq.s32.totalorder %s16, 0
    %p109 = por %p107, %p108
    %p110 = scmp.ne.s32.totalorder %s99, %s102
    %p111 = scmp.eq.s32.totalorder %s21, 1
    %p112 = por %p110, %p111
    %p113 = scmp.ne.s32.totalorder %s102, %s103
    %p114 = scmp.eq.s32.totalorder %s21, 0
    %p115 = por %p113, %p114
    %p116 = scmp.ne.s32.totalorder %s102, %s103
    %p117 = scmp.eq.s32.totalorder %s22, 1
    %p118 = por %p116, %p117
    %p120 = scmp.ne.s32.totalorder %s103, %s119
    %p121 = scmp.eq.s32.totalorder %s22, 0
    %p122 = por %p120, %p121
    %p123 = scmp.le.s32.totalorder 1, %s16
    %p124 = scmp.lt.s32.totalorder %s16, 3
    %p125 = pnand %p123, %p124
    %p126 = pneg %p125
    // Predicated region
    $region9: #{yolov3_postprocess.1} parent=5 // pred_check
      _
    $region10: #{yolov3_postprocess.1} parent=5 // pred_check_branch
      %128 = sbr.rel (%p125) target = $region12
    $region11: #{yolov3_postprocess.1} parent=5 // pred_region
      %s129 = ssub.s32 %s16, 1
      // Predicated region
      $region13: #{yolov3_postprocess.1} parent=11 // pred_check
        %p130 = pneg %p89
      $region14: #{yolov3_postprocess.1} parent=11 // pred_check_branch
        %132 = sbr.rel (%p130) target = $region16
      $region15: #{yolov3_postprocess.1} parent=11 // pred_region
        _
      $region16: #{yolov3_postprocess.1} parent=11 // pred_fallthru
        _
    $region12: #{yolov3_postprocess.1} parent=5 // pred_fallthru
      _
    %p133 = scmp.lt.s32.totalorder %s16, 2
    // Predicated region
    $region17: #{yolov3_postprocess.1} parent=5 // pred_check
      %p134 = pneg %p133
    $region18: #{yolov3_postprocess.1} parent=5 // pred_check_branch
      %136 = sbr.rel (%p134) target = $region20
    $region19: #{yolov3_postprocess.1} parent=5 // pred_region
      // Predicated region
      $region21: #{yolov3_postprocess.1} parent=19 // pred_check
        %p137 = pneg %p36
      $region22: #{yolov3_postprocess.1} parent=19 // pred_check_branch
        %139 = sbr.rel (%p137) target = $region24
      $region23: #{yolov3_postprocess.1} parent=19 // pred_region
        %p140 = scmp.lt.s32.totalorder %s16, 1
        %s141 = scalar_select %p140, %s16, 1
        %s142 = smul.addr %s141, 3
        %s143 = smul.addr %s142, 8
        %s144 = scalar_lea.vmem %s1, %s143
      $region24: #{yolov3_postprocess.1} parent=19 // pred_fallthru
        _
      // Predicated region
      $region25: #{yolov3_postprocess.1} parent=19 // pred_check
        %p145 = pneg %p62
      $region26: #{yolov3_postprocess.1} parent=19 // pred_check_branch
        %147 = sbr.rel (%p145) target = $region28
      $region27: #{yolov3_postprocess.1} parent=19 // pred_region
        %p148 = scmp.lt.s32.totalorder %s16, 1
        %s149 = scalar_select %p148, %s16, 1
        %s150 = smul.addr %s149, 3
        %s151 = smul.addr %s150, 2
        %s152 = scalar_lea.vmem %s2, %s151
      $region28: #{yolov3_postprocess.1} parent=19 // pred_fallthru
        _
    $region20: #{yolov3_postprocess.1} parent=5 // pred_fallthru
      _
    %p153 = scmp.le.s32.totalorder 1, %s16
    %p154 = scmp.lt.s32.totalorder %s16, 3
    %p155 = pnand %p153, %p154
    %p156 = pneg %p155
    // Predicated region
    $region29: #{yolov3_postprocess.1} parent=5 // pred_check
      _
    $region30: #{yolov3_postprocess.1} parent=5 // pred_check_branch
      %158 = sbr.rel (%p155) target = $region32
    $region31: #{yolov3_postprocess.1} parent=5 // pred_region
      %s159 = ssub.s32 %s16, 1
      %p160 = scmp.lt.s32.totalorder %s21, 1
      %s161 = scalar_select %p160, %s21, 1
      %s162 = smul.addr %s161, 3
      %s163 = smul.addr %s162, 8
      %s164 = scalar_lea.vmem %s1, %s163
      %p165 = pneg %p42
      %p166 = pneg %p39
      %p167 = scmp.lt.s32.totalorder %s21, 1
      %s168 = scalar_select %p167, %s21, 1
      %s169 = smul.addr %s168, 3
      %s170 = smul.addr %s169, 2
      %s171 = scalar_lea.vmem %s2, %s170
      %p172 = pneg %p68
      %p173 = pneg %p65
      %p174 = pneg %p89
      %p175 = pneg %p86
      %p176 = pneg %p115
      %p177 = pneg %p112
      %p178 = scmp.lt.s32.totalorder %s21, 1
      %s179 = scalar_select %p178, %s21, 1
      %s180 = smul.addr %s179, 3
      %s181 = smul.addr %s180, 8
      %s182 = scalar_lea.vmem %s4, %s181
      %p183 = scmp.lt.s32.totalorder %s21, 1
      %s184 = scalar_select %p183, %s21, 1
      %s185 = smul.addr %s184, 3
      %s186 = smul.addr %s185, 8
      %s187 = scalar_lea.vmem %s1, %s186
      %p188 = scmp.lt.s32.totalorder %s21, 1
      %s189 = scalar_select %p188, %s21, 1
      %s190 = smul.addr %s189, 3
      %s191 = smul.addr %s190, 2
      %s192 = scalar_lea.vmem %s2, %s191
      %p193 = scmp.lt.s32.totalorder %s21, 1
      %s194 = scalar_select %p193, %s21, 1
      %s195 = smul.addr %s194, 3
      %s196 = smul.addr %s195, 8
      %s197 = scalar_lea.vmem %s4, %s196
      %s198 = smul.u32 %s21, 128
      %s199 = sld [smem:[#allocation3 + %s198]]
      %s200 = scvt.s32.f32 %s199
      %s201 = sadd.s32 %s198, 1
      %s202 = sld [smem:[#allocation3 + %s201]]
      %s203 = scvt.s32.f32 %s202
      %v204 = vld [vmem:[%s3] sm:$0x1f]
      %v205 = vld [vmem:[%s3 + $0x8] sm:$0x1f]
      %v206 = vld [vmem:[%s3 + $0x10] sm:$0x1f]
      %vm207 = vcmp.gt.f32.partialorder %v204, 0.5
      %vm208 = vcmp.gt.f32.partialorder %v205, 0.5
      %vm209 = vcmp.gt.f32.partialorder %v206, 0.5
      %v210 = vld [vmem:[%s187] sm:$0x1f]
      %v211 = vld [vmem:[%s187 + $0x8] sm:$0x1f]
      %v212 = vld [vmem:[%s187 + $0x10] sm:$0x1f]
      %v213 = vmin.f32 %v210, 4.1351666
      %v214 = vmin.f32 %v211, 4.1351666
      %v215 = vmin.f32 %v212, 4.1351666
      %v219 = vrot.slane %v204, 6
      %v220 = vrot.slane %v205, 6
      %v221 = vrot.slane %v206, 6
      %v225 = vsub.f32 %v204, %v219
      %v226 = vsub.f32 %v205, %v220
      %v227 = vsub.f32 %v206, %v221
      %v228 = vadd.f32 %v225, 1.0
      %v229 = vadd.f32 %v226, 1.0
      %v230 = vadd.f32 %v227, 1.0
      %v231 = vmul.f32 %v228, 0.5
      %v232 = vmul.f32 %v229, 0.5
      %v233 = vmul.f32 %v230, 0.5
      %v237 = vrot.slane %v231, 2
      %v238 = vrot.slane %v232, 2
      %v239 = vrot.slane %v233, 2
      %v243 = vadd.f32 %v204, %v237
      %v244 = vadd.f32 %v205, %v238
      %v245 = vadd.f32 %v206, %v239
      %v249 = vrot.slane %v228, 2
      %v250 = vrot.slane %v229, 2
      %v251 = vrot.slane %v230, 2
      %v255 = vmul.f32 %v210, %v249
      %v256 = vmul.f32 %v211, %v250
      %v257 = vmul.f32 %v212, %v251
      %v258 = vadd.f32 %v255, %v243
      %v259 = vadd.f32 %v256, %v244
      %v260 = vadd.f32 %v257, %v245
      %v261 = vmul.f32 %v213, 1.442695
      %v262 = vpow.pop %v261
      %v263 = vmul.f32 %v214, 1.442695
      %v264 = vpow.pop %v263
      %v265 = vmul.f32 %v215, 1.442695
      %v266 = vpow.pop %v265
      %v267 = vmul.f32 %v262, %v228
      %v268 = vmul.f32 %v264, %v229
      %v269 = vmul.f32 %v266, %v230
      %v270 = vmul.f32 %v267, 0.5
      %v271 = vmul.f32 %v268, 0.5
      %v272 = vmul.f32 %v269, 0.5
      %v276 = vrot.slane %v270, 2
      %v277 = vrot.slane %v271, 2
      %v278 = vrot.slane %v272, 2
      %v282 = vsub.f32 %v258, %v276
      %v283 = vsub.f32 %v259, %v277
      %v284 = vsub.f32 %v260, %v278
      %v285 = vadd.f32 %v258, %v276
      %v286 = vadd.f32 %v259, %v277
      %v287 = vadd.f32 %v260, %v278
      %v288 = vsub.f32 %v285, 1.0
      %v289 = vsub.f32 %v286, 1.0
      %v290 = vsub.f32 %v287, 1.0
      %v291 = vlaneseq
      %v292 = vshrl.u32 %v291, 7
      %vm293 = vcmp.eq.s32.totalorder %v292, 0
      %s294 = ssub.f32 %s200, 1.0
      %s295 = ssub.f32 %s203, 1.0
      %v296 = vstv %s294
      %v297 = vstv %s295
      %v298 = vsel %vm293, %v296, %v297
      %v299 = vmax.f32 %v282, 0.0
      %v300 = vmax.f32 %v283, 0.0
      %v301 = vmax.f32 %v284, 0.0
      %v302 = vmin.f32 %v298, %v299
      %v303 = vmin.f32 %v298, %v300
      %v304 = vmin.f32 %v298, %v301
      %v305 = vmax.f32 %v288, 0.0
      %v306 = vmax.f32 %v289, 0.0
      %v307 = vmax.f32 %v290, 0.0
      %v308 = vmin.f32 %v298, %v305
      %v309 = vmin.f32 %v298, %v306
      %v310 = vmin.f32 %v298, %v307
      %v311 = vsub.f32 %v308, %v302
      %v312 = vsub.f32 %v309, %v303
      %v313 = vsub.f32 %v310, %v304
      %v314 = vadd.f32 %v311, 1.0
      %v315 = vadd.f32 %v312, 1.0
      %v316 = vadd.f32 %v313, 1.0
      %vm317 = vcmp.ge.f32.partialorder %v314, 2.0
      %vm318 = vcmp.ge.f32.partialorder %v315, 2.0
      %vm319 = vcmp.ge.f32.partialorder %v316, 2.0
      %v320 = vsel %vm317, 1, 0
      %v321 = vsel %vm318, 1, 0
      %v322 = vsel %vm319, 1, 0
      %v323 = vrot.slane %v320, 1
      %v324 = vrot.slane %v321, 1
      %v325 = vrot.slane %v322, 1
      %vm326 = vcmp.ne.s32.totalorder %v323, 0
      %vm327 = vcmp.ne.s32.totalorder %v324, 0
      %vm328 = vcmp.ne.s32.totalorder %v325, 0
      %vm329 = vmand %vm317, %vm326
      %vm330 = vmand %vm318, %vm327
      %vm331 = vmand %vm319, %vm328
      %v332 = vxor.u32 %v210, 2147483648
      %v333 = vxor.u32 %v211, 2147483648
      %v334 = vxor.u32 %v212, 2147483648
      %v335 = vmul.f32 %v332, 1.442695
      %v336 = vpow.pop %v335
      %v337 = vmul.f32 %v333, 1.442695
      %v338 = vpow.pop %v337
      %v339 = vmul.f32 %v334, 1.442695
      %v340 = vpow.pop %v339
      %v341 = vadd.f32 %v336, 1.0
      %v342 = vadd.f32 %v338, 1.0
      %v343 = vadd.f32 %v340, 1.0
      %v344 = vrcp.pop %v341
      %v345 = vmul.f32 1.0, %v344
      %v346 = vrcp.pop %v342
      %v347 = vmul.f32 1.0, %v346
      %v348 = vrcp.pop %v343
      %v349 = vmul.f32 1.0, %v348
      %v350 = vsel %vm207, %v345, -inf
      %v351 = vsel %vm208, %v347, -inf
      %v352 = vsel %vm209, %v349, -inf
      %v353 = vsel %vm329, 1, 0
      %v354 = vsel %vm330, 1, 0
      %v355 = vsel %vm331, 1, 0
      %v356 = vrot.slane %v353, 4
      %v357 = vrot.slane %v354, 4
      %v358 = vrot.slane %v355, 4
      %vm359 = vcmp.ne.s32.totalorder %v356, 0
      %vm360 = vcmp.ne.s32.totalorder %v357, 0
      %vm361 = vcmp.ne.s32.totalorder %v358, 0
      %vm362 = vmand %vm207, %vm359
      %vm363 = vmand %vm208, %vm360
      %vm364 = vmand %vm209, %vm361
      %v365 = vsel %vm362, %v345, -inf
      %v366 = vsel %vm363, %v347, -inf
      %v367 = vsel %vm364, %v349, -inf
      %v368 = vld [vmem:[%s192] sm:$0x3f]
      %v369 = vunpack.c.l.bf16 %v368
      %v370 = vunpack.c.h.bf16 %v368
      %v372 = vcombine.high %v369, %v369
      %vm374 = vcmask 1043456
      %v375 = vsel %vm374, %v369, -inf
      %v376 = vrot.slane %v375, 4
      %v377 = vmax.f32 %v375, %v376
      %v378 = vrot.slane %v377, 2
      %v379 = vmax.f32 %v377, %v378
      %v380 = vrot.slane %v379, 1
      %v381 = vmax.f32 %v379, %v380
      %v382 = vsel %vm374, %v372, -inf
      %v383 = vrot.slane %v382, 4
      %v384 = vmax.f32 %v382, %v383
      %v385 = vrot.slane %v384, 2
      %v386 = vmax.f32 %v384, %v385
      %v387 = vrot.slane %v386, 1
      %v388 = vmax.f32 %v386, %v387
      %v389 = vsel %vm374, %v370, -inf
      %v390 = vrot.slane %v389, 4
      %v391 = vmax.f32 %v389, %v390
      %v392 = vrot.slane %v391, 2
      %v393 = vmax.f32 %v391, %v392
      %v394 = vrot.slane %v393, 1
      %v395 = vmax.f32 %v393, %v394
      %v398 = vcombine.low %v381, %v388
      %vm400 = vcmp.ge.f32.partialorder %v369, %v398
      %vm401 = vcmp.ge.f32.partialorder %v370, %v395
      %v403 = vunpack.c.l.s4 839922192
      %v404 = vunpack.c.0.s8 %v403
      %v405 = vlaneseq
      %v406 = vshrl.u32 %v405, 7
      %v407 = vsub.s32 %v404, %v406
      %v408 = vrot.slane %v292, %v407
      %v409 = vsel %vm400, %v408, 4
      %v410 = vsel %vm401, %v408, 4
      %v411 = vcombine.high %v409, %v409
      %v412 = vsel %vm374, %v409, 2147483647
      %v413 = vrot.slane %v412, 4
      %vm414 = vcmp.lt.s32.totalorder %v412, %v413
      %v415 = vsel %vm414, %v412, %v413
      %v416 = vrot.slane %v415, 2
      %vm417 = vcmp.lt.s32.totalorder %v415, %v416
      %v418 = vsel %vm417, %v415, %v416
      %v419 = vrot.slane %v418, 1
      %vm420 = vcmp.lt.s32.totalorder %v418, %v419
      %v421 = vsel %vm420, %v418, %v419
      %v422 = vsel %vm374, %v411, 2147483647
      %v423 = vrot.slane %v422, 4
      %vm424 = vcmp.lt.s32.totalorder %v422, %v423
      %v425 = vsel %vm424, %v422, %v423
      %v426 = vrot.slane %v425, 2
      %vm427 = vcmp.lt.s32.totalorder %v425, %v426
      %v428 = vsel %vm427, %v425, %v426
      %v429 = vrot.slane %v428, 1
      %vm430 = vcmp.lt.s32.totalorder %v428, %v429
      %v431 = vsel %vm430, %v428, %v429
      %v432 = vsel %vm374, %v410, 2147483647
      %v433 = vrot.slane %v432, 4
      %vm434 = vcmp.lt.s32.totalorder %v432, %v433
      %v435 = vsel %vm434, %v432, %v433
      %v436 = vrot.slane %v435, 2
      %vm437 = vcmp.lt.s32.totalorder %v435, %v436
      %v438 = vsel %vm437, %v435, %v436
      %v439 = vrot.slane %v438, 1
      %vm440 = vcmp.lt.s32.totalorder %v438, %v439
      %v441 = vsel %vm440, %v438, %v439
      %v442 = vadd.s32 %v421, 1
      %v443 = vadd.s32 %v431, 1
      %v444 = vadd.s32 %v441, 1
      %v445 = vcvt.s32.f32 %v442
      %v446 = vcvt.s32.f32 %v443
      %v447 = vcvt.s32.f32 %v444
      %v451 = vrot.slane %v308, 6
      %v452 = vrot.slane %v309, 6
      %v453 = vrot.slane %v310, 6
      %v460 = vrot.slane %v365, 7
      %v461 = vrot.slane %v366, 7
      %v462 = vrot.slane %v367, 7
      %vm466 = vcmask 1041408
      %v467 = vsel %vm466, %v302, %v451
      %v468 = vsel %vm466, %v303, %v452
      %v469 = vsel %vm466, %v304, %v453
      %v470 = vsel %vm374, %v467, %v350
      %v471 = vsel %vm374, %v468, %v351
      %v472 = vsel %vm374, %v469, %v352
      %vm473 = vcmask 1044480
      %v474 = vsel %vm473, %v470, %v460
      %v475 = vsel %vm473, %v471, %v461
      %v476 = vsel %vm473, %v472, %v462
      %vm477 = vcmask 1045504
      %v478 = vsel %vm477, %v474, %v445
      %v479 = vsel %vm477, %v475, %v446
      %v480 = vsel %vm477, %v476, %v447
      %vm481 = vcmask 1046528
      %v482 = vsel %vm481, %v478, 0.0
      %v483 = vsel %vm481, %v479, 0.0
      %v484 = vsel %vm481, %v480, 0.0
      %485 = vst [vmem:[%s197] sm:$0xff] %v482
      %486 = vst [vmem:[%s197 + $0x8] sm:$0xff] %v483
      %487 = vst [vmem:[%s197 + $0x10] sm:$0xff] %v484
      %p488 = scmp.lt.s32.totalorder %s21, 1
      %s489 = scalar_select %p488, %s21, 1
      %s490 = smul.addr %s489, 3
      %s491 = smul.addr %s490, 8
      %s492 = scalar_lea.vmem %s4, %s491
      // Predicated region
      $region33: #{yolov3_postprocess.1} parent=31 // pred_check
        %p493 = pneg %p112
      $region34: #{yolov3_postprocess.1} parent=31 // pred_check_branch
        %495 = sbr.rel (%p493) target = $region36
      $region35: #{yolov3_postprocess.1} parent=31 // pred_region
        _
      $region36: #{yolov3_postprocess.1} parent=31 // pred_fallthru
        _
    $region32: #{yolov3_postprocess.1} parent=5 // pred_fallthru
      _
    %p496 = scmp.le.s32.totalorder 2, %s16
    // Predicated region
    $region37: #{yolov3_postprocess.1} parent=5 // pred_check
      %p497 = pneg %p496
    $region38: #{yolov3_postprocess.1} parent=5 // pred_check_branch
      %499 = sbr.rel (%p497) target = $region40
    $region39: #{yolov3_postprocess.1} parent=5 // pred_region
      %s500 = ssub.s32 %s16, 2
      // Predicated region
      $region41: #{yolov3_postprocess.1} parent=39 // pred_check
        %p501 = pneg %p118
      $region42: #{yolov3_postprocess.1} parent=39 // pred_check_branch
        %503 = sbr.rel (%p501) target = $region44
      $region43: #{yolov3_postprocess.1} parent=39 // pred_region
        %p504 = scmp.lt.s32.totalorder %s22, 1
        %s505 = scalar_select %p504, %s22, 1
        %s506 = smul.addr %s505, 3
        %s507 = smul.addr %s506, 8
        %s508 = scalar_lea.vmem %s4, %s507
      $region44: #{yolov3_postprocess.1} parent=39 // pred_fallthru
        _
    $region40: #{yolov3_postprocess.1} parent=5 // pred_fallthru
      _
  $region6: #{yolov3_postprocess.1} parent=0 // loop_footer
    %s20 = sadd.s32 1, %s16
  $region7: #{yolov3_postprocess.1} parent=0 // loop_footer_branch
    %15 = sbr.rel target = $region3
  $region8: #{yolov3_postprocess.1} parent=0 // loop_exit
    _

</llo_original>
